<compile_context>
chip_gen: v6e
topology: v6e:2x2x1
jax: 0.10.0
libtpu: 0.0.40
codegen_flags: <defaults>
</compile_context>

<pallas_src>
import jax
import jax.numpy as jnp
from jax.experimental import pallas as pl
from jax.experimental.pallas import tpu as pltpu


def _fused_conv1x1_kernel(x1_ref, x2_ref, w_ref, o_ref):
    """o[0] = W1 @ x1 + W2 @ x2  (pre-bias), channels x pixels layout.

    x1_ref/x2_ref: (1, Cin, T)   pixels on lanes (lane-dense)
    w_ref:         (Cout, 2*Cin) fused weights [W1 | W2]
    o_ref:         (1, Cout, T)
    The channel contraction is 2*Cin VPU broadcast FMAs (MXU skipped).
    """
    cin = x1_ref.shape[1]
    x1 = x1_ref[0]                 # (Cin, T)
    x2 = x2_ref[0]                 # (Cin, T)
    w = w_ref[...]                 # (Cout, 2*Cin)

    acc = w[:, 0:1] * x1[0:1, :]                              # (Cout, T)
    acc = acc + w[:, cin:cin + 1] * x2[0:1, :]
    for ci in range(1, cin):                                  # static unroll
        acc = acc + w[:, ci:ci + 1] * x1[ci:ci + 1, :]
        acc = acc + w[:, cin + ci:cin + ci + 1] * x2[ci:ci + 1, :]

    o_ref[0] = acc.astype(o_ref.dtype)


def _pick_pixel_tile(hw: int, max_tile: int = 2048) -> int:
    """Largest lane-aligned (multiple of 128) tile that evenly divides hw."""
    if hw <= max_tile:
        return hw
    t = (max_tile // 128) * 128
    while t >= 128:
        if hw % t == 0:
            return t
        t -= 128
    return hw  # fallback: whole pixel axis in one block


@jax.jit
def conv1x1_pad1_add(x1, x2, w1, b1, w2, b2):
    """x1, x2: (N, Cin, H, W) f32. w*: (Cout, Cin, 1, 1). b*: (Cout,)."""
    N, Cin, H, W = x1.shape
    Cout = w1.shape[0]
    HW = H * W
    T = _pick_pixel_tile(HW)

    # Lane-dense layout straight from NCHW: just flatten the minor spatial
    # dims (no transpose, no input zero-padding).
    x1f = x1.reshape(N, Cin, HW)
    x2f = x2.reshape(N, Cin, HW)
    w_cat = jnp.concatenate(
        [w1.reshape(Cout, Cin), w2.reshape(Cout, Cin)], axis=1)   # (Cout, 2Cin)
    b_sum = (b1 + b2).astype(jnp.float32)

    grid = (N, HW // T)
    flops = 2 * N * HW * (2 * Cin) * Cout
    bytes_accessed = 4 * (2 * N * Cin * HW + N * Cout * HW + Cout * 2 * Cin)

    prebias = pl.pallas_call(
        _fused_conv1x1_kernel,
        out_shape=jax.ShapeDtypeStruct((N, Cout, HW), jnp.float32),
        grid=grid,
        in_specs=[
            pl.BlockSpec((1, Cin, T), lambda n, p: (n, 0, p)),
            pl.BlockSpec((1, Cin, T), lambda n, p: (n, 0, p)),
            pl.BlockSpec((Cout, 2 * Cin), lambda n, p: (0, 0)),
        ],
        out_specs=pl.BlockSpec((1, Cout, T), lambda n, p: (n, 0, p)),
        compiler_params=pltpu.CompilerParams(
            dimension_semantics=("parallel", "parallel")),
        cost_estimate=pl.CostEstimate(
            flops=flops, transcendentals=0, bytes_accessed=bytes_accessed),
    )(x1f, x2f, w_cat)

    # padding=1 with a 1x1 kernel: border pixels only ever see zero padding,
    # so the summed output border is exactly b1 + b2.  Zero-pad the pre-bias
    # interior and add the fused bias once (single fused XLA output pass).
    out = jnp.pad(prebias.reshape(N, Cout, H, W),
                  ((0, 0), (0, 0), (1, 1), (1, 1)))
    return out + b_sum[None, :, None, None]          # NCHW (N, Cout, H+2, W+2)


def reference(x1, x2, w1, b1, w2, b2):
    """Plain-JAX reference using lax conv (NCHW)."""
    dn = jax.lax.conv_dimension_numbers(x1.shape, w1.shape,
                                        ("NCHW", "OIHW", "NCHW"))
    v1 = jax.lax.conv_general_dilated(x1, w1, (1, 1), ((1, 1), (1, 1)),
                                      dimension_numbers=dn)
    v2 = jax.lax.conv_general_dilated(x2, w2, (1, 1), ((1, 1), (1, 1)),
                                      dimension_numbers=dn)
    v1 = v1 + b1[None, :, None, None]
    v2 = v2 + b2[None, :, None, None]
    return v1 + v2


if __name__ == "__main__":
    key = jax.random.PRNGKey(0)
    k1, k2, k3, k4, k5, k6 = jax.random.split(key, 6)

    # Shapes implied by the PyTorch spec: x = (1, 3, 64, 64), Conv2d(3, 8, 1).
    N, Cin, H, W, Cout = 1, 3, 64, 64, 8

    x1 = jax.random.normal(k1, (N, Cin, H, W), dtype=jnp.float32)
    x2 = jax.random.normal(k2, (N, Cin, H, W), dtype=jnp.float32)

    bound = 1.0 / (Cin ** 0.5)
    w1 = jax.random.uniform(k3, (Cout, Cin, 1, 1), minval=-bound, maxval=bound,
                            dtype=jnp.float32)
    b1 = jax.random.uniform(k4, (Cout,), minval=-bound, maxval=bound,
                            dtype=jnp.float32)
    w2 = jax.random.uniform(k5, (Cout, Cin, 1, 1), minval=-bound, maxval=bound,
                            dtype=jnp.float32)
    b2 = jax.random.uniform(k6, (Cout,), minval=-bound, maxval=bound,
                            dtype=jnp.float32)

    out = jax.block_until_ready(conv1x1_pad1_add(x1, x2, w1, b1, w2, b2))
    ref = jax.block_until_ready(reference(x1, x2, w1, b1, w2, b2))

    assert out.shape == (N, Cout, H + 2, W + 2), out.shape
    assert jnp.allclose(out, ref, atol=1e-5, rtol=1e-5), "mismatch vs reference"

    print("KERNEL_OK")
</pallas_src>

<mosaic_0001>
module attributes {stable_mosaic.version = 11 : i64} {
  func.func @_fused_conv1x1_kernel(%arg0: i32, %arg1: i32, %arg2: memref<1x3x2048xf32, #tpu.memory_space<vmem>>, %arg3: memref<1x3x2048xf32, #tpu.memory_space<vmem>>, %arg4: memref<8x6xf32, #tpu.memory_space<vmem>>, %arg5: memref<1x8x2048xf32, #tpu.memory_space<vmem>>) attributes {dimension_semantics = [#tpu.dimension_semantics<parallel>, #tpu.dimension_semantics<parallel>], iteration_bounds = array<i64: 1, 2>, scalar_prefetch = 0 : i64, scratch_operands = 0 : i64, tpu.core_type = #tpu.core_type<tc>, window_params = [{transform_indices = @transform_0, window_bounds = array<i64: 1, 3, 2048>}, {transform_indices = @transform_1, window_bounds = array<i64: 1, 3, 2048>}, {pipeline_mode = #tpu.pipeline_mode<synchronous>, transform_indices = @transform_2, window_bounds = array<i64: 8, 6>}, {transform_indices = @transform_3, window_bounds = array<i64: 1, 8, 2048>}]} {
    %c0 = arith.constant 0 : index
    %c0_0 = arith.constant 0 : index
    %c0_1 = arith.constant 0 : index
    %0 = vector.load %arg2[%c0, %c0_0, %c0_1] : memref<1x3x2048xf32, #tpu.memory_space<vmem>>, vector<1x3x2048xf32>
    %1 = vector.shape_cast %0 : vector<1x3x2048xf32> to vector<3x2048xf32>
    %c0_2 = arith.constant 0 : index
    %c0_3 = arith.constant 0 : index
    %c0_4 = arith.constant 0 : index
    %2 = vector.load %arg3[%c0_2, %c0_3, %c0_4] : memref<1x3x2048xf32, #tpu.memory_space<vmem>>, vector<1x3x2048xf32>
    %3 = vector.shape_cast %2 : vector<1x3x2048xf32> to vector<3x2048xf32>
    %c0_5 = arith.constant 0 : index
    %c0_6 = arith.constant 0 : index
    %4 = vector.load %arg4[%c0_5, %c0_6] : memref<8x6xf32, #tpu.memory_space<vmem>>, vector<8x6xf32>
    %5 = vector.extract_strided_slice %4 {offsets = [0, 0], sizes = [8, 1], strides = [1, 1]} : vector<8x6xf32> to vector<8x1xf32>
    %6 = vector.extract_strided_slice %1 {offsets = [0, 0], sizes = [1, 2048], strides = [1, 1]} : vector<3x2048xf32> to vector<1x2048xf32>
    %7 = vector.broadcast %5 : vector<8x1xf32> to vector<8x2048xf32>
    %8 = vector.broadcast %6 : vector<1x2048xf32> to vector<8x2048xf32>
    %9 = arith.mulf %7, %8 : vector<8x2048xf32>
    %10 = vector.extract_strided_slice %4 {offsets = [0, 3], sizes = [8, 1], strides = [1, 1]} : vector<8x6xf32> to vector<8x1xf32>
    %11 = vector.extract_strided_slice %3 {offsets = [0, 0], sizes = [1, 2048], strides = [1, 1]} : vector<3x2048xf32> to vector<1x2048xf32>
    %12 = vector.broadcast %10 : vector<8x1xf32> to vector<8x2048xf32>
    %13 = vector.broadcast %11 : vector<1x2048xf32> to vector<8x2048xf32>
    %14 = arith.mulf %12, %13 : vector<8x2048xf32>
    %15 = arith.addf %9, %14 : vector<8x2048xf32>
    %16 = vector.extract_strided_slice %4 {offsets = [0, 1], sizes = [8, 1], strides = [1, 1]} : vector<8x6xf32> to vector<8x1xf32>
    %17 = vector.extract_strided_slice %1 {offsets = [1, 0], sizes = [1, 2048], strides = [1, 1]} : vector<3x2048xf32> to vector<1x2048xf32>
    %18 = vector.broadcast %16 : vector<8x1xf32> to vector<8x2048xf32>
    %19 = vector.broadcast %17 : vector<1x2048xf32> to vector<8x2048xf32>
    %20 = arith.mulf %18, %19 : vector<8x2048xf32>
    %21 = arith.addf %15, %20 : vector<8x2048xf32>
    %22 = vector.extract_strided_slice %4 {offsets = [0, 4], sizes = [8, 1], strides = [1, 1]} : vector<8x6xf32> to vector<8x1xf32>
    %23 = vector.extract_strided_slice %3 {offsets = [1, 0], sizes = [1, 2048], strides = [1, 1]} : vector<3x2048xf32> to vector<1x2048xf32>
    %24 = vector.broadcast %22 : vector<8x1xf32> to vector<8x2048xf32>
    %25 = vector.broadcast %23 : vector<1x2048xf32> to vector<8x2048xf32>
    %26 = arith.mulf %24, %25 : vector<8x2048xf32>
    %27 = arith.addf %21, %26 : vector<8x2048xf32>
    %28 = vector.extract_strided_slice %4 {offsets = [0, 2], sizes = [8, 1], strides = [1, 1]} : vector<8x6xf32> to vector<8x1xf32>
    %29 = vector.extract_strided_slice %1 {offsets = [2, 0], sizes = [1, 2048], strides = [1, 1]} : vector<3x2048xf32> to vector<1x2048xf32>
    %30 = vector.broadcast %28 : vector<8x1xf32> to vector<8x2048xf32>
    %31 = vector.broadcast %29 : vector<1x2048xf32> to vector<8x2048xf32>
    %32 = arith.mulf %30, %31 : vector<8x2048xf32>
    %33 = arith.addf %27, %32 : vector<8x2048xf32>
    %34 = vector.extract_strided_slice %4 {offsets = [0, 5], sizes = [8, 1], strides = [1, 1]} : vector<8x6xf32> to vector<8x1xf32>
    %35 = vector.extract_strided_slice %3 {offsets = [2, 0], sizes = [1, 2048], strides = [1, 1]} : vector<3x2048xf32> to vector<1x2048xf32>
    %36 = vector.broadcast %34 : vector<8x1xf32> to vector<8x2048xf32>
    %37 = vector.broadcast %35 : vector<1x2048xf32> to vector<8x2048xf32>
    %38 = arith.mulf %36, %37 : vector<8x2048xf32>
    %39 = arith.addf %33, %38 : vector<8x2048xf32>
    %c0_7 = arith.constant 0 : index
    %c0_8 = arith.constant 0 : index
    %c0_9 = arith.constant 0 : index
    %40 = vector.load %arg5[%c0_7, %c0_8, %c0_9] : memref<1x8x2048xf32, #tpu.memory_space<vmem>>, vector<1x8x2048xf32>
    %41 = vector.shape_cast %40 : vector<1x8x2048xf32> to vector<8x2048xf32>
    %42 = vector.shape_cast %39 : vector<8x2048xf32> to vector<1x8x2048xf32>
    tpu.vector_store %arg5[%c0_7, %c0_8, %c0_9], %42 {strides = array<i32>} : memref<1x8x2048xf32, #tpu.memory_space<vmem>>, vector<1x8x2048xf32>,
    return
  }
  func.func @transform_0(%arg0: i32, %arg1: i32) -> (i32, i32, i32) {
    %c0_i32 = arith.constant 0 : i32
    %c0_i32_0 = arith.constant 0 : i32
    return %arg0, %c0_i32, %arg1 : i32, i32, i32
  }
  func.func @transform_1(%arg0: i32, %arg1: i32) -> (i32, i32, i32) {
    %c0_i32 = arith.constant 0 : i32
    %c0_i32_0 = arith.constant 0 : i32
    return %arg0, %c0_i32, %arg1 : i32, i32, i32
  }
  func.func @transform_2(%arg0: i32, %arg1: i32) -> (i32, i32) {
    %c0_i32 = arith.constant 0 : i32
    %c0_i32_0 = arith.constant 0 : i32
    %c0_i32_1 = arith.constant 0 : i32
    return %c0_i32, %c0_i32_0 : i32, i32
  }
  func.func @transform_3(%arg0: i32, %arg1: i32) -> (i32, i32, i32) {
    %c0_i32 = arith.constant 0 : i32
    %c0_i32_0 = arith.constant 0 : i32
    return %arg0, %c0_i32, %arg1 : i32, i32, i32
  }
}

</mosaic_0001>

<llo_original>
// kernel: conv1x1_pad1_add.1
$region0: #{conv1x1_pad1_add.1}
  #allocation0 [shape = 'u32[]', space=smem, size = 0x4, offset = 0x4, fixed_abs, tag = 'smem constant byte address 0x4 - core index']
  #allocation1 [shape = 'u32[144,128]{1,0:T(1,128)}', space=vmem, size = 0x12000, scoped, tag = 'internal scratch']
  %s0 = inlined_call_operand.vmem [shape: f32[1,3,4096], index: 0, kind: input, shape index: {}]
  %s1 = inlined_call_operand.vmem [shape: f32[1,3,4096], index: 1, kind: input, shape index: {}]
  %s2 = inlined_call_operand.vmem [shape: f32[8,6], index: 2, kind: input, shape index: {}]
  %s3 = inlined_call_operand.vmem [shape: f32[1,8,4096], index: 3, kind: output, shape index: {}]
  %s4 = sld [smem:[#allocation0]]
  $region45: #{conv1x1_pad1_add.1} parent=0
    _
  %s6 = ssub.s32 1, %s4
  %s7 = scalar_select 0, %s6, %s4
  loop: start=0, step=1, limit=4
  $region2: #{conv1x1_pad1_add.1} parent=0 // loop_pre_header
    _
  $region3: #{conv1x1_pad1_add.1} parent=0 // loop_header
    %s9 = sphi 0, %s13
    %p10 = scmp.ge.s32.totalorder %s9, 4
    %s16 = sphi 0, %s28
    %s17 = sphi 0, %s24
    %s18 = sphi 0, %s16
    %s19 = sphi 0, %s17
    %s20 = sphi 0, %s18
    %s21 = sphi 0, %s19
    %s33 = sphi 0, %s35
    %s36 = sphi 0, %s33
    %s37 = sphi 0, %s36
    %s53 = sphi 0, %s37
    %s61 = sphi 0, %s63
    %s64 = sphi 0, %s61
    %s65 = sphi 0, %s64
    %s81 = sphi 0, %s65
    %s85 = sphi 0, %s85
    %s87 = sphi 0, %s85
    %s88 = sphi 0, %s87
    %s102 = sphi 0, %s88
    %s110 = sphi 0, %s112
    %s113 = sphi 0, %s110
    %s114 = sphi 0, %s113
    %s130 = sphi 0, %s114
  $region4: #{conv1x1_pad1_add.1} parent=0 // loop_header_branch
    %12 = sbr.rel (%p10) target = $region8
  $region5: #{conv1x1_pad1_add.1} parent=0 // loop_body
    %s14 = ssub.s32 %s9, 1
    %s15 = ssub.s32 %s9, 2
    %s22 = sadd.s32 1, %s17
    %p23 = scmp.ge.s32.totalorder %s22, 2
    %s24 = scalar_select %p23, 0, %s22
    %s25 = sadd.s32 1, %s16
    %s26 = scalar_select %p23, %s25, %s16
    %p27 = scmp.ge.s32.totalorder %s26, 1
    %s28 = scalar_select %p27, 0, %s26
    %s29 = ssub.s32 %s16, %s28
    %s30 = ssub.s32 %s17, %s24
    %s31 = sor.u32 %s29, %s30
    %p32 = scmp.eq.s32.totalorder %s31, 0
    %s34 = sadd.s32 %s33, 1
    %s35 = scalar_select %p32, %s33, %s34
    %p38 = pneg %p32
    %p39 = scmp.eq.s32.totalorder %s9, 1
    %p40 = por %p38, %p39
    %p41 = scmp.ne.s32.totalorder %s33, %s36
    %p42 = scmp.eq.s32.totalorder %s9, 0
    %p43 = por %p41, %p42
    %p44 = scmp.ne.s32.totalorder %s33, %s36
    %p45 = scmp.eq.s32.totalorder %s14, 1
    %p46 = por %p44, %p45
    %p47 = scmp.ne.s32.totalorder %s36, %s37
    %p48 = scmp.eq.s32.totalorder %s14, 0
    %p49 = por %p47, %p48
    %p50 = scmp.ne.s32.totalorder %s36, %s37
    %p51 = scmp.eq.s32.totalorder %s15, 1
    %p52 = por %p50, %p51
    %p54 = scmp.ne.s32.totalorder %s37, %s53
    %p55 = scmp.eq.s32.totalorder %s15, 0
    %p56 = por %p54, %p55
    %s57 = ssub.s32 %s16, %s28
    %s58 = ssub.s32 %s17, %s24
    %s59 = sor.u32 %s57, %s58
    %p60 = scmp.eq.s32.totalorder %s59, 0
    %s62 = sadd.s32 %s61, 1
    %s63 = scalar_select %p60, %s61, %s62
    %p66 = pneg %p60
    %p67 = scmp.eq.s32.totalorder %s9, 1
    %p68 = por %p66, %p67
    %p69 = scmp.ne.s32.totalorder %s61, %s64
    %p70 = scmp.eq.s32.totalorder %s9, 0
    %p71 = por %p69, %p70
    %p72 = scmp.ne.s32.totalorder %s61, %s64
    %p73 = scmp.eq.s32.totalorder %s14, 1
    %p74 = por %p72, %p73
    %p75 = scmp.ne.s32.totalorder %s64, %s65
    %p76 = scmp.eq.s32.totalorder %s14, 0
    %p77 = por %p75, %p76
    %p78 = scmp.ne.s32.totalorder %s64, %s65
    %p79 = scmp.eq.s32.totalorder %s15, 1
    %p80 = por %p78, %p79
    %p82 = scmp.ne.s32.totalorder %s65, %s81
    %p83 = scmp.eq.s32.totalorder %s15, 0
    %p84 = por %p82, %p83
    %s86 = sadd.s32 %s85, 1
    %p89 = scmp.eq.s32.totalorder %s9, 1
    %p90 = scmp.ne.s32.totalorder %s85, %s87
    %p91 = scmp.eq.s32.totalorder %s9, 0
    %p92 = por %p90, %p91
    %p93 = scmp.ne.s32.totalorder %s85, %s87
    %p94 = scmp.eq.s32.totalorder %s14, 1
    %p95 = por %p93, %p94
    %p96 = scmp.ne.s32.totalorder %s87, %s88
    %p97 = scmp.eq.s32.totalorder %s14, 0
    %p98 = por %p96, %p97
    %p99 = scmp.ne.s32.totalorder %s87, %s88
    %p100 = scmp.eq.s32.totalorder %s15, 1
    %p101 = por %p99, %p100
    %p103 = scmp.ne.s32.totalorder %s88, %s102
    %p104 = scmp.eq.s32.totalorder %s15, 0
    %p105 = por %p103, %p104
    %s106 = ssub.s32 %s16, %s28
    %s107 = ssub.s32 %s17, %s24
    %s108 = sor.u32 %s106, %s107
    %p109 = scmp.eq.s32.totalorder %s108, 0
    %s111 = sadd.s32 %s110, 1
    %s112 = scalar_select %p109, %s110, %s111
    %p115 = pneg %p109
    %p116 = scmp.eq.s32.totalorder %s9, 1
    %p117 = por %p115, %p116
    %p118 = scmp.ne.s32.totalorder %s110, %s113
    %p119 = scmp.eq.s32.totalorder %s9, 0
    %p120 = por %p118, %p119
    %p121 = scmp.ne.s32.totalorder %s110, %s113
    %p122 = scmp.eq.s32.totalorder %s14, 1
    %p123 = por %p121, %p122
    %p124 = scmp.ne.s32.totalorder %s113, %s114
    %p125 = scmp.eq.s32.totalorder %s14, 0
    %p126 = por %p124, %p125
    %p127 = scmp.ne.s32.totalorder %s113, %s114
    %p128 = scmp.eq.s32.totalorder %s15, 1
    %p129 = por %p127, %p128
    %p131 = scmp.ne.s32.totalorder %s114, %s130
    %p132 = scmp.eq.s32.totalorder %s15, 0
    %p133 = por %p131, %p132
    %p134 = scmp.le.s32.totalorder 1, %s9
    %p135 = scmp.lt.s32.totalorder %s9, 3
    %p136 = pnand %p134, %p135
    %p137 = pneg %p136
    // Predicated region
    $region9: #{conv1x1_pad1_add.1} parent=5 // pred_check
      _
    $region10: #{conv1x1_pad1_add.1} parent=5 // pred_check_branch
      %139 = sbr.rel (%p136) target = $region12
    $region11: #{conv1x1_pad1_add.1} parent=5 // pred_region
      %s140 = ssub.s32 %s9, 1
      // Predicated region
      $region13: #{conv1x1_pad1_add.1} parent=11 // pred_check
        %p141 = pneg %p98
      $region14: #{conv1x1_pad1_add.1} parent=11 // pred_check_branch
        %143 = sbr.rel (%p141) target = $region16
      $region15: #{conv1x1_pad1_add.1} parent=11 // pred_region
        _
      $region16: #{conv1x1_pad1_add.1} parent=11 // pred_fallthru
        _
    $region12: #{conv1x1_pad1_add.1} parent=5 // pred_fallthru
      _
    %p144 = scmp.lt.s32.totalorder %s9, 2
    // Predicated region
    $region17: #{conv1x1_pad1_add.1} parent=5 // pred_check
      %p145 = pneg %p144
    $region18: #{conv1x1_pad1_add.1} parent=5 // pred_check_branch
      %147 = sbr.rel (%p145) target = $region20
    $region19: #{conv1x1_pad1_add.1} parent=5 // pred_region
      // Predicated region
      $region21: #{conv1x1_pad1_add.1} parent=19 // pred_check
        %p148 = pneg %p43
      $region22: #{conv1x1_pad1_add.1} parent=19 // pred_check_branch
        %150 = sbr.rel (%p148) target = $region24
      $region23: #{conv1x1_pad1_add.1} parent=19 // pred_region
        %s151 = smul.u32 16, %s17
        %p152 = scmp.lt.s32.totalorder %s16, 0
        %s153 = scalar_select %p152, %s16, 0
        %p154 = scmp.lt.s32.totalorder %s151, 31
        %s155 = scalar_select %p154, %s151, 31
        %s156 = smul.addr %s153, 32
        %s157 = sadd.s32 %s155, %s156
        %s158 = smul.addr %s157, 4
        %s159 = scalar_lea.vmem %s0, %s158
        %s160 = smul.u32 16, %s17
      $region24: #{conv1x1_pad1_add.1} parent=19 // pred_fallthru
        _
      // Predicated region
      $region25: #{conv1x1_pad1_add.1} parent=19 // pred_check
        %p161 = pneg %p71
      $region26: #{conv1x1_pad1_add.1} parent=19 // pred_check_branch
        %163 = sbr.rel (%p161) target = $region28
      $region27: #{conv1x1_pad1_add.1} parent=19 // pred_region
        %s164 = smul.u32 16, %s17
        %p165 = scmp.lt.s32.totalorder %s16, 0
        %s166 = scalar_select %p165, %s16, 0
        %p167 = scmp.lt.s32.totalorder %s164, 31
        %s168 = scalar_select %p167, %s164, 31
        %s169 = smul.addr %s166, 32
        %s170 = sadd.s32 %s168, %s169
        %s171 = smul.addr %s170, 4
        %s172 = scalar_lea.vmem %s1, %s171
        %s173 = smul.u32 16, %s17
      $region28: #{conv1x1_pad1_add.1} parent=19 // pred_fallthru
        _
    $region20: #{conv1x1_pad1_add.1} parent=5 // pred_fallthru
      _
    %p174 = scmp.le.s32.totalorder 1, %s9
    %p175 = scmp.lt.s32.totalorder %s9, 3
    %p176 = pnand %p174, %p175
    %p177 = pneg %p176
    // Predicated region
    $region29: #{conv1x1_pad1_add.1} parent=5 // pred_check
      _
    $region30: #{conv1x1_pad1_add.1} parent=5 // pred_check_branch
      %179 = sbr.rel (%p176) target = $region32
    $region31: #{conv1x1_pad1_add.1} parent=5 // pred_region
      %s180 = ssub.s32 %s9, 1
      %s181 = smul.u32 16, %s19
      %p182 = scmp.lt.s32.totalorder %s18, 0
      %s183 = scalar_select %p182, %s18, 0
      %p184 = scmp.lt.s32.totalorder %s181, 31
      %s185 = scalar_select %p184, %s181, 31
      %s186 = smul.addr %s183, 32
      %s187 = sadd.s32 %s185, %s186
      %s188 = smul.addr %s187, 4
      %s189 = scalar_lea.vmem %s0, %s188
      %p190 = pneg %p49
      %p191 = pneg %p46
      %s192 = smul.u32 16, %s19
      %p193 = scmp.lt.s32.totalorder %s18, 0
      %s194 = scalar_select %p193, %s18, 0
      %p195 = scmp.lt.s32.totalorder %s192, 31
      %s196 = scalar_select %p195, %s192, 31
      %s197 = smul.addr %s194, 32
      %s198 = sadd.s32 %s196, %s197
      %s199 = smul.addr %s198, 4
      %s200 = scalar_lea.vmem %s1, %s199
      %p201 = pneg %p77
      %p202 = pneg %p74
      %p203 = pneg %p98
      %p204 = pneg %p95
      %p205 = pneg %p126
      %p206 = pneg %p123
      %s207 = smul.u32 16, %s19
      %p208 = scmp.lt.s32.totalorder %s18, 0
      %s209 = scalar_select %p208, %s18, 0
      %p210 = scmp.lt.s32.totalorder %s207, 31
      %s211 = scalar_select %p210, %s207, 31
      %s212 = smul.addr %s209, 32
      %s213 = sadd.s32 %s211, %s212
      %s214 = smul.addr %s213, 8
      %s215 = scalar_lea.vmem %s3, %s214
      %s216 = smul.u32 16, %s19
      %p217 = scmp.lt.s32.totalorder %s18, 0
      %s218 = scalar_select %p217, %s18, 0
      %p219 = scmp.lt.s32.totalorder %s216, 31
      %s220 = scalar_select %p219, %s216, 31
      %s221 = smul.addr %s218, 32
      %s222 = sadd.s32 %s220, %s221
      %s223 = smul.addr %s222, 4
      %s224 = scalar_lea.vmem %s0, %s223
      %s225 = smul.u32 16, %s19
      %s226 = smul.u32 16, %s19
      %p227 = scmp.lt.s32.totalorder %s18, 0
      %s228 = scalar_select %p227, %s18, 0
      %p229 = scmp.lt.s32.totalorder %s226, 31
      %s230 = scalar_select %p229, %s226, 31
      %s231 = smul.addr %s228, 32
      %s232 = sadd.s32 %s230, %s231
      %s233 = smul.addr %s232, 4
      %s234 = scalar_lea.vmem %s1, %s233
      %s235 = smul.u32 16, %s19
      %s236 = smul.u32 16, %s19
      %p237 = scmp.lt.s32.totalorder %s18, 0
      %s238 = scalar_select %p237, %s18, 0
      %p239 = scmp.lt.s32.totalorder %s236, 31
      %s240 = scalar_select %p239, %s236, 31
      %s241 = smul.addr %s238, 32
      %s242 = sadd.s32 %s240, %s241
      %s243 = smul.addr %s242, 8
      %s244 = scalar_lea.vmem %s3, %s243
      %s245 = smul.u32 16, %s19
      %v246 = vld [vmem:[%s224] sm:$0x77]
      %v247 = vld [vmem:[%s224 + $0x8] sm:$0x77]
      %v248 = vld [vmem:[%s224 + $0x10] sm:$0x77]
      %v249 = vld [vmem:[%s224 + $0x18] sm:$0x77]
      %v250 = vld [vmem:[%s224 + $0x20] sm:$0x77]
      %v251 = vld [vmem:[%s224 + $0x28] sm:$0x77]
      %v252 = vld [vmem:[%s224 + $0x30] sm:$0x77]
      %v253 = vld [vmem:[%s224 + $0x38] sm:$0x77]
      %v254 = vld [vmem:[%s234] sm:$0x77]
      %v255 = vld [vmem:[%s234 + $0x8] sm:$0x77]
      %v256 = vld [vmem:[%s234 + $0x10] sm:$0x77]
      %v257 = vld [vmem:[%s234 + $0x18] sm:$0x77]
      %v258 = vld [vmem:[%s234 + $0x20] sm:$0x77]
      %v259 = vld [vmem:[%s234 + $0x28] sm:$0x77]
      %v260 = vld [vmem:[%s234 + $0x30] sm:$0x77]
      %v261 = vld [vmem:[%s234 + $0x38] sm:$0x77]
      %v262 = vld [vmem:[%s2] sm:$0xff]
      %264 = vset.pattern.permute.xlu0 0
      %265 = vperm.xlu0 %264, %v262
      %v266 = vpop.permute.xlu0 %265
      %v276 = vlaneseq
      %v277 = vshrl.u32 %v276, 7
      %v278 = vsub.s32 0, %v277
      %v279 = vrot.slane %v246, %v278
      %v280 = vlaneseq
      %v281 = vshrl.u32 %v280, 7
      %v282 = vsub.s32 4, %v281
      %v283 = vrot.slane %v246, %v282
      %v284 = vlaneseq
      %v285 = vshrl.u32 %v284, 7
      %v286 = vsub.s32 0, %v285
      %v287 = vrot.slane %v247, %v286
      %v288 = vlaneseq
      %v289 = vshrl.u32 %v288, 7
      %v290 = vsub.s32 4, %v289
      %v291 = vrot.slane %v247, %v290
      %v292 = vlaneseq
      %v293 = vshrl.u32 %v292, 7
      %v294 = vsub.s32 0, %v293
      %v295 = vrot.slane %v248, %v294
      %v296 = vlaneseq
      %v297 = vshrl.u32 %v296, 7
      %v298 = vsub.s32 4, %v297
      %v299 = vrot.slane %v248, %v298
      %v300 = vlaneseq
      %v301 = vshrl.u32 %v300, 7
      %v302 = vsub.s32 0, %v301
      %v303 = vrot.slane %v249, %v302
      %v304 = vlaneseq
      %v305 = vshrl.u32 %v304, 7
      %v306 = vsub.s32 4, %v305
      %v307 = vrot.slane %v249, %v306
      %v308 = vlaneseq
      %v309 = vshrl.u32 %v308, 7
      %v310 = vsub.s32 0, %v309
      %v311 = vrot.slane %v250, %v310
      %v312 = vlaneseq
      %v313 = vshrl.u32 %v312, 7
      %v314 = vsub.s32 4, %v313
      %v315 = vrot.slane %v250, %v314
      %v316 = vlaneseq
      %v317 = vshrl.u32 %v316, 7
      %v318 = vsub.s32 0, %v317
      %v319 = vrot.slane %v251, %v318
      %v320 = vlaneseq
      %v321 = vshrl.u32 %v320, 7
      %v322 = vsub.s32 4, %v321
      %v323 = vrot.slane %v251, %v322
      %v324 = vlaneseq
      %v325 = vshrl.u32 %v324, 7
      %v326 = vsub.s32 0, %v325
      %v327 = vrot.slane %v252, %v326
      %v328 = vlaneseq
      %v329 = vshrl.u32 %v328, 7
      %v330 = vsub.s32 4, %v329
      %v331 = vrot.slane %v252, %v330
      %v332 = vlaneseq
      %v333 = vshrl.u32 %v332, 7
      %v334 = vsub.s32 0, %v333
      %v335 = vrot.slane %v253, %v334
      %v336 = vlaneseq
      %v337 = vshrl.u32 %v336, 7
      %v338 = vsub.s32 4, %v337
      %v339 = vrot.slane %v253, %v338
      %v356 = vlaneseq
      %v357 = vshrl.u32 %v356, 7
      %v358 = vsub.s32 0, %v357
      %v359 = vrot.slane %v279, %v358
      %v360 = vlaneseq
      %v361 = vshrl.u32 %v360, 7
      %v362 = vsub.s32 0, %v361
      %v363 = vrot.slane %v283, %v362
      %v364 = vlaneseq
      %v365 = vshrl.u32 %v364, 7
      %v366 = vsub.s32 0, %v365
      %v367 = vrot.slane %v287, %v366
      %v368 = vlaneseq
      %v369 = vshrl.u32 %v368, 7
      %v370 = vsub.s32 0, %v369
      %v371 = vrot.slane %v291, %v370
      %v372 = vlaneseq
      %v373 = vshrl.u32 %v372, 7
      %v374 = vsub.s32 0, %v373
      %v375 = vrot.slane %v295, %v374
      %v376 = vlaneseq
      %v377 = vshrl.u32 %v376, 7
      %v378 = vsub.s32 0, %v377
      %v379 = vrot.slane %v299, %v378
      %v380 = vlaneseq
      %v381 = vshrl.u32 %v380, 7
      %v382 = vsub.s32 0, %v381
      %v383 = vrot.slane %v303, %v382
      %v384 = vlaneseq
      %v385 = vshrl.u32 %v384, 7
      %v386 = vsub.s32 0, %v385
      %v387 = vrot.slane %v307, %v386
      %v388 = vlaneseq
      %v389 = vshrl.u32 %v388, 7
      %v390 = vsub.s32 0, %v389
      %v391 = vrot.slane %v311, %v390
      %v392 = vlaneseq
      %v393 = vshrl.u32 %v392, 7
      %v394 = vsub.s32 0, %v393
      %v395 = vrot.slane %v315, %v394
      %v396 = vlaneseq
      %v397 = vshrl.u32 %v396, 7
      %v398 = vsub.s32 0, %v397
      %v399 = vrot.slane %v319, %v398
      %v400 = vlaneseq
      %v401 = vshrl.u32 %v400, 7
      %v402 = vsub.s32 0, %v401
      %v403 = vrot.slane %v323, %v402
      %v404 = vlaneseq
      %v405 = vshrl.u32 %v404, 7
      %v406 = vsub.s32 0, %v405
      %v407 = vrot.slane %v327, %v406
      %v408 = vlaneseq
      %v409 = vshrl.u32 %v408, 7
      %v410 = vsub.s32 0, %v409
      %v411 = vrot.slane %v331, %v410
      %v412 = vlaneseq
      %v413 = vshrl.u32 %v412, 7
      %v414 = vsub.s32 0, %v413
      %v415 = vrot.slane %v335, %v414
      %v416 = vlaneseq
      %v417 = vshrl.u32 %v416, 7
      %v418 = vsub.s32 0, %v417
      %v419 = vrot.slane %v339, %v418
      %v420 = vmul.f32 %v266, %v359
      %v421 = vmul.f32 %v266, %v363
      %v422 = vmul.f32 %v266, %v367
      %v423 = vmul.f32 %v266, %v371
      %v424 = vmul.f32 %v266, %v375
      %v425 = vmul.f32 %v266, %v379
      %v426 = vmul.f32 %v266, %v383
      %v427 = vmul.f32 %v266, %v387
      %v428 = vmul.f32 %v266, %v391
      %v429 = vmul.f32 %v266, %v395
      %v430 = vmul.f32 %v266, %v399
      %v431 = vmul.f32 %v266, %v403
      %v432 = vmul.f32 %v266, %v407
      %v433 = vmul.f32 %v266, %v411
      %v434 = vmul.f32 %v266, %v415
      %v435 = vmul.f32 %v266, %v419
      %436 = vset.pattern.permute.xlu0 3
      %437 = vperm.xlu0 %436, %v262
      %v438 = vpop.permute.xlu0 %437
      %v448 = vlaneseq
      %v449 = vshrl.u32 %v448, 7
      %v450 = vsub.s32 0, %v449
      %v451 = vrot.slane %v254, %v450
      %v452 = vlaneseq
      %v453 = vshrl.u32 %v452, 7
      %v454 = vsub.s32 4, %v453
      %v455 = vrot.slane %v254, %v454
      %v456 = vlaneseq
      %v457 = vshrl.u32 %v456, 7
      %v458 = vsub.s32 0, %v457
      %v459 = vrot.slane %v255, %v458
      %v460 = vlaneseq
      %v461 = vshrl.u32 %v460, 7
      %v462 = vsub.s32 4, %v461
      %v463 = vrot.slane %v255, %v462
      %v464 = vlaneseq
      %v465 = vshrl.u32 %v464, 7
      %v466 = vsub.s32 0, %v465
      %v467 = vrot.slane %v256, %v466
      %v468 = vlaneseq
      %v469 = vshrl.u32 %v468, 7
      %v470 = vsub.s32 4, %v469
      %v471 = vrot.slane %v256, %v470
      %v472 = vlaneseq
      %v473 = vshrl.u32 %v472, 7
      %v474 = vsub.s32 0, %v473
      %v475 = vrot.slane %v257, %v474
      %v476 = vlaneseq
      %v477 = vshrl.u32 %v476, 7
      %v478 = vsub.s32 4, %v477
      %v479 = vrot.slane %v257, %v478
      %v480 = vlaneseq
      %v481 = vshrl.u32 %v480, 7
      %v482 = vsub.s32 0, %v481
      %v483 = vrot.slane %v258, %v482
      %v484 = vlaneseq
      %v485 = vshrl.u32 %v484, 7
      %v486 = vsub.s32 4, %v485
      %v487 = vrot.slane %v258, %v486
      %v488 = vlaneseq
      %v489 = vshrl.u32 %v488, 7
      %v490 = vsub.s32 0, %v489
      %v491 = vrot.slane %v259, %v490
      %v492 = vlaneseq
      %v493 = vshrl.u32 %v492, 7
      %v494 = vsub.s32 4, %v493
      %v495 = vrot.slane %v259, %v494
      %v496 = vlaneseq
      %v497 = vshrl.u32 %v496, 7
      %v498 = vsub.s32 0, %v497
      %v499 = vrot.slane %v260, %v498
      %v500 = vlaneseq
      %v501 = vshrl.u32 %v500, 7
      %v502 = vsub.s32 4, %v501
      %v503 = vrot.slane %v260, %v502
      %v504 = vlaneseq
      %v505 = vshrl.u32 %v504, 7
      %v506 = vsub.s32 0, %v505
      %v507 = vrot.slane %v261, %v506
      %v508 = vlaneseq
      %v509 = vshrl.u32 %v508, 7
      %v510 = vsub.s32 4, %v509
      %v511 = vrot.slane %v261, %v510
      %v528 = vlaneseq
      %v529 = vshrl.u32 %v528, 7
      %v530 = vsub.s32 0, %v529
      %v531 = vrot.slane %v451, %v530
      %v532 = vlaneseq
      %v533 = vshrl.u32 %v532, 7
      %v534 = vsub.s32 0, %v533
      %v535 = vrot.slane %v455, %v534
      %v536 = vlaneseq
      %v537 = vshrl.u32 %v536, 7
      %v538 = vsub.s32 0, %v537
      %v539 = vrot.slane %v459, %v538
      %v540 = vlaneseq
      %v541 = vshrl.u32 %v540, 7
      %v542 = vsub.s32 0, %v541
      %v543 = vrot.slane %v463, %v542
      %v544 = vlaneseq
      %v545 = vshrl.u32 %v544, 7
      %v546 = vsub.s32 0, %v545
      %v547 = vrot.slane %v467, %v546
      %v548 = vlaneseq
      %v549 = vshrl.u32 %v548, 7
      %v550 = vsub.s32 0, %v549
      %v551 = vrot.slane %v471, %v550
      %v552 = vlaneseq
      %v553 = vshrl.u32 %v552, 7
      %v554 = vsub.s32 0, %v553
      %v555 = vrot.slane %v475, %v554
      %v556 = vlaneseq
      %v557 = vshrl.u32 %v556, 7
      %v558 = vsub.s32 0, %v557
      %v559 = vrot.slane %v479, %v558
      %v560 = vlaneseq
      %v561 = vshrl.u32 %v560, 7
      %v562 = vsub.s32 0, %v561
      %v563 = vrot.slane %v483, %v562
      %v564 = vlaneseq
      %v565 = vshrl.u32 %v564, 7
      %v566 = vsub.s32 0, %v565
      %v567 = vrot.slane %v487, %v566
      %v568 = vlaneseq
      %v569 = vshrl.u32 %v568, 7
      %v570 = vsub.s32 0, %v569
      %v571 = vrot.slane %v491, %v570
      %v572 = vlaneseq
      %v573 = vshrl.u32 %v572, 7
      %v574 = vsub.s32 0, %v573
      %v575 = vrot.slane %v495, %v574
      %v576 = vlaneseq
      %v577 = vshrl.u32 %v576, 7
      %v578 = vsub.s32 0, %v577
      %v579 = vrot.slane %v499, %v578
      %v580 = vlaneseq
      %v581 = vshrl.u32 %v580, 7
      %v582 = vsub.s32 0, %v581
      %v583 = vrot.slane %v503, %v582
      %v584 = vlaneseq
      %v585 = vshrl.u32 %v584, 7
      %v586 = vsub.s32 0, %v585
      %v587 = vrot.slane %v507, %v586
      %v588 = vlaneseq
      %v589 = vshrl.u32 %v588, 7
      %v590 = vsub.s32 0, %v589
      %v591 = vrot.slane %v511, %v590
      %v592 = vmul.f32 %v438, %v531
      %v593 = vmul.f32 %v438, %v535
      %v594 = vmul.f32 %v438, %v539
      %v595 = vmul.f32 %v438, %v543
      %v596 = vmul.f32 %v438, %v547
      %v597 = vmul.f32 %v438, %v551
      %v598 = vmul.f32 %v438, %v555
      %v599 = vmul.f32 %v438, %v559
      %v600 = vmul.f32 %v438, %v563
      %v601 = vmul.f32 %v438, %v567
      %v602 = vmul.f32 %v438, %v571
      %v603 = vmul.f32 %v438, %v575
      %v604 = vmul.f32 %v438, %v579
      %v605 = vmul.f32 %v438, %v583
      %v606 = vmul.f32 %v438, %v587
      %v607 = vmul.f32 %v438, %v591
      %v608 = vadd.f32 %v420, %v592
      %v609 = vadd.f32 %v421, %v593
      %v610 = vadd.f32 %v422, %v594
      %v611 = vadd.f32 %v423, %v595
      %v612 = vadd.f32 %v424, %v596
      %v613 = vadd.f32 %v425, %v597
      %v614 = vadd.f32 %v426, %v598
      %v615 = vadd.f32 %v427, %v599
      %v616 = vadd.f32 %v428, %v600
      %v617 = vadd.f32 %v429, %v601
      %v618 = vadd.f32 %v430, %v602
      %v619 = vadd.f32 %v431, %v603
      %v620 = vadd.f32 %v432, %v604
      %v621 = vadd.f32 %v433, %v605
      %v622 = vadd.f32 %v434, %v606
      %v623 = vadd.f32 %v435, %v607
      %624 = vset.pattern.permute.xlu0 1
      %625 = vperm.xlu0 %624, %v262
      %v626 = vpop.permute.xlu0 %625
      %v628 = vlaneseq
      %v629 = vshrl.u32 %v628, 7
      %v630 = vsub.s32 1, %v629
      %v631 = vrot.slane %v246, %v630
      %v632 = vlaneseq
      %v633 = vshrl.u32 %v632, 7
      %v634 = vsub.s32 5, %v633
      %v635 = vrot.slane %v246, %v634
      %v636 = vlaneseq
      %v637 = vshrl.u32 %v636, 7
      %v638 = vsub.s32 1, %v637
      %v639 = vrot.slane %v247, %v638
      %v640 = vlaneseq
      %v641 = vshrl.u32 %v640, 7
      %v642 = vsub.s32 5, %v641
      %v643 = vrot.slane %v247, %v642
      %v644 = vlaneseq
      %v645 = vshrl.u32 %v644, 7
      %v646 = vsub.s32 1, %v645
      %v647 = vrot.slane %v248, %v646
      %v648 = vlaneseq
      %v649 = vshrl.u32 %v648, 7
      %v650 = vsub.s32 5, %v649
      %v651 = vrot.slane %v248, %v650
      %v652 = vlaneseq
      %v653 = vshrl.u32 %v652, 7
      %v654 = vsub.s32 1, %v653
      %v655 = vrot.slane %v249, %v654
      %v656 = vlaneseq
      %v657 = vshrl.u32 %v656, 7
      %v658 = vsub.s32 5, %v657
      %v659 = vrot.slane %v249, %v658
      %v660 = vlaneseq
      %v661 = vshrl.u32 %v660, 7
      %v662 = vsub.s32 1, %v661
      %v663 = vrot.slane %v250, %v662
      %v664 = vlaneseq
      %v665 = vshrl.u32 %v664, 7
      %v666 = vsub.s32 5, %v665
      %v667 = vrot.slane %v250, %v666
      %v668 = vlaneseq
      %v669 = vshrl.u32 %v668, 7
      %v670 = vsub.s32 1, %v669
      %v671 = vrot.slane %v251, %v670
      %v672 = vlaneseq
      %v673 = vshrl.u32 %v672, 7
      %v674 = vsub.s32 5, %v673
      %v675 = vrot.slane %v251, %v674
      %v676 = vlaneseq
      %v677 = vshrl.u32 %v676, 7
      %v678 = vsub.s32 1, %v677
      %v679 = vrot.slane %v252, %v678
      %v680 = vlaneseq
      %v681 = vshrl.u32 %v680, 7
      %v682 = vsub.s32 5, %v681
      %v683 = vrot.slane %v252, %v682
      %v684 = vlaneseq
      %v685 = vshrl.u32 %v684, 7
      %v686 = vsub.s32 1, %v685
      %v687 = vrot.slane %v253, %v686
      %v688 = vlaneseq
      %v689 = vshrl.u32 %v688, 7
      %v690 = vsub.s32 5, %v689
      %v691 = vrot.slane %v253, %v690
      %v708 = vlaneseq
      %v709 = vshrl.u32 %v708, 7
      %v710 = vsub.s32 1, %v709
      %v711 = vrot.slane %v631, %v710
      %v712 = vlaneseq
      %v713 = vshrl.u32 %v712, 7
      %v714 = vsub.s32 1, %v713
      %v715 = vrot.slane %v635, %v714
      %v716 = vlaneseq
      %v717 = vshrl.u32 %v716, 7
      %v718 = vsub.s32 1, %v717
      %v719 = vrot.slane %v639, %v718
      %v720 = vlaneseq
      %v721 = vshrl.u32 %v720, 7
      %v722 = vsub.s32 1, %v721
      %v723 = vrot.slane %v643, %v722
      %v724 = vlaneseq
      %v725 = vshrl.u32 %v724, 7
      %v726 = vsub.s32 1, %v725
      %v727 = vrot.slane %v647, %v726
      %v728 = vlaneseq
      %v729 = vshrl.u32 %v728, 7
      %v730 = vsub.s32 1, %v729
      %v731 = vrot.slane %v651, %v730
      %v732 = vlaneseq
      %v733 = vshrl.u32 %v732, 7
      %v734 = vsub.s32 1, %v733
      %v735 = vrot.slane %v655, %v734
      %v736 = vlaneseq
      %v737 = vshrl.u32 %v736, 7
      %v738 = vsub.s32 1, %v737
      %v739 = vrot.slane %v659, %v738
      %v740 = vlaneseq
      %v741 = vshrl.u32 %v740, 7
      %v742 = vsub.s32 1, %v741
      %v743 = vrot.slane %v663, %v742
      %v744 = vlaneseq
      %v745 = vshrl.u32 %v744, 7
      %v746 = vsub.s32 1, %v745
      %v747 = vrot.slane %v667, %v746
      %v748 = vlaneseq
      %v749 = vshrl.u32 %v748, 7
      %v750 = vsub.s32 1, %v749
      %v751 = vrot.slane %v671, %v750
      %v752 = vlaneseq
      %v753 = vshrl.u32 %v752, 7
      %v754 = vsub.s32 1, %v753
      %v755 = vrot.slane %v675, %v754
      %v756 = vlaneseq
      %v757 = vshrl.u32 %v756, 7
      %v758 = vsub.s32 1, %v757
      %v759 = vrot.slane %v679, %v758
      %v760 = vlaneseq
      %v761 = vshrl.u32 %v760, 7
      %v762 = vsub.s32 1, %v761
      %v763 = vrot.slane %v683, %v762
      %v764 = vlaneseq
      %v765 = vshrl.u32 %v764, 7
      %v766 = vsub.s32 1, %v765
      %v767 = vrot.slane %v687, %v766
      %v768 = vlaneseq
      %v769 = vshrl.u32 %v768, 7
      %v770 = vsub.s32 1, %v769
      %v771 = vrot.slane %v691, %v770
      %v772 = vmul.f32 %v626, %v711
      %v773 = vmul.f32 %v626, %v715
      %v774 = vmul.f32 %v626, %v719
      %v775 = vmul.f32 %v626, %v723
      %v776 = vmul.f32 %v626, %v727
      %v777 = vmul.f32 %v626, %v731
      %v778 = vmul.f32 %v626, %v735
      %v779 = vmul.f32 %v626, %v739
      %v780 = vmul.f32 %v626, %v743
      %v781 = vmul.f32 %v626, %v747
      %v782 = vmul.f32 %v626, %v751
      %v783 = vmul.f32 %v626, %v755
      %v784 = vmul.f32 %v626, %v759
      %v785 = vmul.f32 %v626, %v763
      %v786 = vmul.f32 %v626, %v767
      %v787 = vmul.f32 %v626, %v771
      %v788 = vadd.f32 %v608, %v772
      %v789 = vadd.f32 %v609, %v773
      %v790 = vadd.f32 %v610, %v774
      %v791 = vadd.f32 %v611, %v775
      %v792 = vadd.f32 %v612, %v776
      %v793 = vadd.f32 %v613, %v777
      %v794 = vadd.f32 %v614, %v778
      %v795 = vadd.f32 %v615, %v779
      %v796 = vadd.f32 %v616, %v780
      %v797 = vadd.f32 %v617, %v781
      %v798 = vadd.f32 %v618, %v782
      %v799 = vadd.f32 %v619, %v783
      %v800 = vadd.f32 %v620, %v784
      %v801 = vadd.f32 %v621, %v785
      %v802 = vadd.f32 %v622, %v786
      %v803 = vadd.f32 %v623, %v787
      %804 = vset.pattern.permute.xlu0 4
      %805 = vperm.xlu0 %804, %v262
      %v806 = vpop.permute.xlu0 %805
      %v808 = vlaneseq
      %v809 = vshrl.u32 %v808, 7
      %v810 = vsub.s32 1, %v809
      %v811 = vrot.slane %v254, %v810
      %v812 = vlaneseq
      %v813 = vshrl.u32 %v812, 7
      %v814 = vsub.s32 5, %v813
      %v815 = vrot.slane %v254, %v814
      %v816 = vlaneseq
      %v817 = vshrl.u32 %v816, 7
      %v818 = vsub.s32 1, %v817
      %v819 = vrot.slane %v255, %v818
      %v820 = vlaneseq
      %v821 = vshrl.u32 %v820, 7
      %v822 = vsub.s32 5, %v821
      %v823 = vrot.slane %v255, %v822
      %v824 = vlaneseq
      %v825 = vshrl.u32 %v824, 7
      %v826 = vsub.s32 1, %v825
      %v827 = vrot.slane %v256, %v826
      %v828 = vlaneseq
      %v829 = vshrl.u32 %v828, 7
      %v830 = vsub.s32 5, %v829
      %v831 = vrot.slane %v256, %v830
      %v832 = vlaneseq
      %v833 = vshrl.u32 %v832, 7
      %v834 = vsub.s32 1, %v833
      %v835 = vrot.slane %v257, %v834
      %v836 = vlaneseq
      %v837 = vshrl.u32 %v836, 7
      %v838 = vsub.s32 5, %v837
      %v839 = vrot.slane %v257, %v838
      %v840 = vlaneseq
      %v841 = vshrl.u32 %v840, 7
      %v842 = vsub.s32 1, %v841
      %v843 = vrot.slane %v258, %v842
      %v844 = vlaneseq
      %v845 = vshrl.u32 %v844, 7
      %v846 = vsub.s32 5, %v845
      %v847 = vrot.slane %v258, %v846
      %v848 = vlaneseq
      %v849 = vshrl.u32 %v848, 7
      %v850 = vsub.s32 1, %v849
      %v851 = vrot.slane %v259, %v850
      %v852 = vlaneseq
      %v853 = vshrl.u32 %v852, 7
      %v854 = vsub.s32 5, %v853
      %v855 = vrot.slane %v259, %v854
      %v856 = vlaneseq
      %v857 = vshrl.u32 %v856, 7
      %v858 = vsub.s32 1, %v857
      %v859 = vrot.slane %v260, %v858
      %v860 = vlaneseq
      %v861 = vshrl.u32 %v860, 7
      %v862 = vsub.s32 5, %v861
      %v863 = vrot.slane %v260, %v862
      %v864 = vlaneseq
      %v865 = vshrl.u32 %v864, 7
      %v866 = vsub.s32 1, %v865
      %v867 = vrot.slane %v261, %v866
      %v868 = vlaneseq
      %v869 = vshrl.u32 %v868, 7
      %v870 = vsub.s32 5, %v869
      %v871 = vrot.slane %v261, %v870
      %v888 = vlaneseq
      %v889 = vshrl.u32 %v888, 7
      %v890 = vsub.s32 1, %v889
      %v891 = vrot.slane %v811, %v890
      %v892 = vlaneseq
      %v893 = vshrl.u32 %v892, 7
      %v894 = vsub.s32 1, %v893
      %v895 = vrot.slane %v815, %v894
      %v896 = vlaneseq
      %v897 = vshrl.u32 %v896, 7
      %v898 = vsub.s32 1, %v897
      %v899 = vrot.slane %v819, %v898
      %v900 = vlaneseq
      %v901 = vshrl.u32 %v900, 7
      %v902 = vsub.s32 1, %v901
      %v903 = vrot.slane %v823, %v902
      %v904 = vlaneseq
      %v905 = vshrl.u32 %v904, 7
      %v906 = vsub.s32 1, %v905
      %v907 = vrot.slane %v827, %v906
      %v908 = vlaneseq
      %v909 = vshrl.u32 %v908, 7
      %v910 = vsub.s32 1, %v909
      %v911 = vrot.slane %v831, %v910
      %v912 = vlaneseq
      %v913 = vshrl.u32 %v912, 7
      %v914 = vsub.s32 1, %v913
      %v915 = vrot.slane %v835, %v914
      %v916 = vlaneseq
      %v917 = vshrl.u32 %v916, 7
      %v918 = vsub.s32 1, %v917
      %v919 = vrot.slane %v839, %v918
      %v920 = vlaneseq
      %v921 = vshrl.u32 %v920, 7
      %v922 = vsub.s32 1, %v921
      %v923 = vrot.slane %v843, %v922
      %v924 = vlaneseq
      %v925 = vshrl.u32 %v924, 7
      %v926 = vsub.s32 1, %v925
      %v927 = vrot.slane %v847, %v926
      %v928 = vlaneseq
      %v929 = vshrl.u32 %v928, 7
      %v930 = vsub.s32 1, %v929
      %v931 = vrot.slane %v851, %v930
      %v932 = vlaneseq
      %v933 = vshrl.u32 %v932, 7
      %v934 = vsub.s32 1, %v933
      %v935 = vrot.slane %v855, %v934
      %v936 = vlaneseq
      %v937 = vshrl.u32 %v936, 7
      %v938 = vsub.s32 1, %v937
      %v939 = vrot.slane %v859, %v938
      %v940 = vlaneseq
      %v941 = vshrl.u32 %v940, 7
      %v942 = vsub.s32 1, %v941
      %v943 = vrot.slane %v863, %v942
      %v944 = vlaneseq
      %v945 = vshrl.u32 %v944, 7
      %v946 = vsub.s32 1, %v945
      %v947 = vrot.slane %v867, %v946
      %v948 = vlaneseq
      %v949 = vshrl.u32 %v948, 7
      %v950 = vsub.s32 1, %v949
      %v951 = vrot.slane %v871, %v950
      %v952 = vmul.f32 %v806, %v891
      %v953 = vmul.f32 %v806, %v895
      %v954 = vmul.f32 %v806, %v899
      %v955 = vmul.f32 %v806, %v903
      %v956 = vmul.f32 %v806, %v907
      %v957 = vmul.f32 %v806, %v911
      %v958 = vmul.f32 %v806, %v915
      %v959 = vmul.f32 %v806, %v919
      %v960 = vmul.f32 %v806, %v923
      %v961 = vmul.f32 %v806, %v927
      %v962 = vmul.f32 %v806, %v931
      %v963 = vmul.f32 %v806, %v935
      %v964 = vmul.f32 %v806, %v939
      %v965 = vmul.f32 %v806, %v943
      %v966 = vmul.f32 %v806, %v947
      %v967 = vmul.f32 %v806, %v951
      %v968 = vadd.f32 %v788, %v952
      %v969 = vadd.f32 %v789, %v953
      %v970 = vadd.f32 %v790, %v954
      %v971 = vadd.f32 %v791, %v955
      %v972 = vadd.f32 %v792, %v956
      %v973 = vadd.f32 %v793, %v957
      %v974 = vadd.f32 %v794, %v958
      %v975 = vadd.f32 %v795, %v959
      %v976 = vadd.f32 %v796, %v960
      %v977 = vadd.f32 %v797, %v961
      %v978 = vadd.f32 %v798, %v962
      %v979 = vadd.f32 %v799, %v963
      %v980 = vadd.f32 %v800, %v964
      %v981 = vadd.f32 %v801, %v965
      %v982 = vadd.f32 %v802, %v966
      %v983 = vadd.f32 %v803, %v967
      %984 = vset.pattern.permute.xlu0 2
      %985 = vperm.xlu0 %984, %v262
      %v986 = vpop.permute.xlu0 %985
      %v988 = vlaneseq
      %v989 = vshrl.u32 %v988, 7
      %v990 = vsub.s32 2, %v989
      %v991 = vrot.slane %v246, %v990
      %v992 = vlaneseq
      %v993 = vshrl.u32 %v992, 7
      %v994 = vsub.s32 6, %v993
      %v995 = vrot.slane %v246, %v994
      %v996 = vlaneseq
      %v997 = vshrl.u32 %v996, 7
      %v998 = vsub.s32 2, %v997
      %v999 = vrot.slane %v247, %v998
      %v1000 = vlaneseq
      %v1001 = vshrl.u32 %v1000, 7
      %v1002 = vsub.s32 6, %v1001
      %v1003 = vrot.slane %v247, %v1002
      %v1004 = vlaneseq
      %v1005 = vshrl.u32 %v1004, 7
      %v1006 = vsub.s32 2, %v1005
      %v1007 = vrot.slane %v248, %v1006
      %v1008 = vlaneseq
      %v1009 = vshrl.u32 %v1008, 7
      %v1010 = vsub.s32 6, %v1009
      %v1011 = vrot.slane %v248, %v1010
      %v1012 = vlaneseq
      %v1013 = vshrl.u32 %v1012, 7
      %v1014 = vsub.s32 2, %v1013
      %v1015 = vrot.slane %v249, %v1014
      %v1016 = vlaneseq
      %v1017 = vshrl.u32 %v1016, 7
      %v1018 = vsub.s32 6, %v1017
      %v1019 = vrot.slane %v249, %v1018
      %v1020 = vlaneseq
      %v1021 = vshrl.u32 %v1020, 7
      %v1022 = vsub.s32 2, %v1021
      %v1023 = vrot.slane %v250, %v1022
      %v1024 = vlaneseq
      %v1025 = vshrl.u32 %v1024, 7
      %v1026 = vsub.s32 6, %v1025
      %v1027 = vrot.slane %v250, %v1026
      %v1028 = vlaneseq
      %v1029 = vshrl.u32 %v1028, 7
      %v1030 = vsub.s32 2, %v1029
      %v1031 = vrot.slane %v251, %v1030
      %v1032 = vlaneseq
      %v1033 = vshrl.u32 %v1032, 7
      %v1034 = vsub.s32 6, %v1033
      %v1035 = vrot.slane %v251, %v1034
      %v1036 = vlaneseq
      %v1037 = vshrl.u32 %v1036, 7
      %v1038 = vsub.s32 2, %v1037
      %v1039 = vrot.slane %v252, %v1038
      %v1040 = vlaneseq
      %v1041 = vshrl.u32 %v1040, 7
      %v1042 = vsub.s32 6, %v1041
      %v1043 = vrot.slane %v252, %v1042
      %v1044 = vlaneseq
      %v1045 = vshrl.u32 %v1044, 7
      %v1046 = vsub.s32 2, %v1045
      %v1047 = vrot.slane %v253, %v1046
      %v1048 = vlaneseq
      %v1049 = vshrl.u32 %v1048, 7
      %v1050 = vsub.s32 6, %v1049
      %v1051 = vrot.slane %v253, %v1050
      %v1068 = vlaneseq
      %v1069 = vshrl.u32 %v1068, 7
      %v1070 = vsub.s32 2, %v1069
      %v1071 = vrot.slane %v991, %v1070
      %v1072 = vlaneseq
      %v1073 = vshrl.u32 %v1072, 7
      %v1074 = vsub.s32 2, %v1073
      %v1075 = vrot.slane %v995, %v1074
      %v1076 = vlaneseq
      %v1077 = vshrl.u32 %v1076, 7
      %v1078 = vsub.s32 2, %v1077
      %v1079 = vrot.slane %v999, %v1078
      %v1080 = vlaneseq
      %v1081 = vshrl.u32 %v1080, 7
      %v1082 = vsub.s32 2, %v1081
      %v1083 = vrot.slane %v1003, %v1082
      %v1084 = vlaneseq
      %v1085 = vshrl.u32 %v1084, 7
      %v1086 = vsub.s32 2, %v1085
      %v1087 = vrot.slane %v1007, %v1086
      %v1088 = vlaneseq
      %v1089 = vshrl.u32 %v1088, 7
      %v1090 = vsub.s32 2, %v1089
      %v1091 = vrot.slane %v1011, %v1090
      %v1092 = vlaneseq
      %v1093 = vshrl.u32 %v1092, 7
      %v1094 = vsub.s32 2, %v1093
      %v1095 = vrot.slane %v1015, %v1094
      %v1096 = vlaneseq
      %v1097 = vshrl.u32 %v1096, 7
      %v1098 = vsub.s32 2, %v1097
      %v1099 = vrot.slane %v1019, %v1098
      %v1100 = vlaneseq
      %v1101 = vshrl.u32 %v1100, 7
      %v1102 = vsub.s32 2, %v1101
      %v1103 = vrot.slane %v1023, %v1102
      %v1104 = vlaneseq
      %v1105 = vshrl.u32 %v1104, 7
      %v1106 = vsub.s32 2, %v1105
      %v1107 = vrot.slane %v1027, %v1106
      %v1108 = vlaneseq
      %v1109 = vshrl.u32 %v1108, 7
      %v1110 = vsub.s32 2, %v1109
      %v1111 = vrot.slane %v1031, %v1110
      %v1112 = vlaneseq
      %v1113 = vshrl.u32 %v1112, 7
      %v1114 = vsub.s32 2, %v1113
      %v1115 = vrot.slane %v1035, %v1114
      %v1116 = vlaneseq
      %v1117 = vshrl.u32 %v1116, 7
      %v1118 = vsub.s32 2, %v1117
      %v1119 = vrot.slane %v1039, %v1118
      %v1120 = vlaneseq
      %v1121 = vshrl.u32 %v1120, 7
      %v1122 = vsub.s32 2, %v1121
      %v1123 = vrot.slane %v1043, %v1122
      %v1124 = vlaneseq
      %v1125 = vshrl.u32 %v1124, 7
      %v1126 = vsub.s32 2, %v1125
      %v1127 = vrot.slane %v1047, %v1126
      %v1128 = vlaneseq
      %v1129 = vshrl.u32 %v1128, 7
      %v1130 = vsub.s32 2, %v1129
      %v1131 = vrot.slane %v1051, %v1130
      %v1132 = vmul.f32 %v986, %v1071
      %v1133 = vmul.f32 %v986, %v1075
      %v1134 = vmul.f32 %v986, %v1079
      %v1135 = vmul.f32 %v986, %v1083
      %v1136 = vmul.f32 %v986, %v1087
      %v1137 = vmul.f32 %v986, %v1091
      %v1138 = vmul.f32 %v986, %v1095
      %v1139 = vmul.f32 %v986, %v1099
      %v1140 = vmul.f32 %v986, %v1103
      %v1141 = vmul.f32 %v986, %v1107
      %v1142 = vmul.f32 %v986, %v1111
      %v1143 = vmul.f32 %v986, %v1115
      %v1144 = vmul.f32 %v986, %v1119
      %v1145 = vmul.f32 %v986, %v1123
      %v1146 = vmul.f32 %v986, %v1127
      %v1147 = vmul.f32 %v986, %v1131
      %v1148 = vadd.f32 %v968, %v1132
      %v1149 = vadd.f32 %v969, %v1133
      %v1150 = vadd.f32 %v970, %v1134
      %v1151 = vadd.f32 %v971, %v1135
      %v1152 = vadd.f32 %v972, %v1136
      %v1153 = vadd.f32 %v973, %v1137
      %v1154 = vadd.f32 %v974, %v1138
      %v1155 = vadd.f32 %v975, %v1139
      %v1156 = vadd.f32 %v976, %v1140
      %v1157 = vadd.f32 %v977, %v1141
      %v1158 = vadd.f32 %v978, %v1142
      %v1159 = vadd.f32 %v979, %v1143
      %v1160 = vadd.f32 %v980, %v1144
      %v1161 = vadd.f32 %v981, %v1145
      %v1162 = vadd.f32 %v982, %v1146
      %v1163 = vadd.f32 %v983, %v1147
      %1164 = vset.pattern.permute.xlu0 5
      %1165 = vperm.xlu0 %1164, %v262
      %v1166 = vpop.permute.xlu0 %1165
      %v1168 = vlaneseq
      %v1169 = vshrl.u32 %v1168, 7
      %v1170 = vsub.s32 2, %v1169
      %v1171 = vrot.slane %v254, %v1170
      %v1172 = vlaneseq
      %v1173 = vshrl.u32 %v1172, 7
      %v1174 = vsub.s32 6, %v1173
      %v1175 = vrot.slane %v254, %v1174
      %v1176 = vlaneseq
      %v1177 = vshrl.u32 %v1176, 7
      %v1178 = vsub.s32 2, %v1177
      %v1179 = vrot.slane %v255, %v1178
      %v1180 = vlaneseq
      %v1181 = vshrl.u32 %v1180, 7
      %v1182 = vsub.s32 6, %v1181
      %v1183 = vrot.slane %v255, %v1182
      %v1184 = vlaneseq
      %v1185 = vshrl.u32 %v1184, 7
      %v1186 = vsub.s32 2, %v1185
      %v1187 = vrot.slane %v256, %v1186
      %v1188 = vlaneseq
      %v1189 = vshrl.u32 %v1188, 7
      %v1190 = vsub.s32 6, %v1189
      %v1191 = vrot.slane %v256, %v1190
      %v1192 = vlaneseq
      %v1193 = vshrl.u32 %v1192, 7
      %v1194 = vsub.s32 2, %v1193
      %v1195 = vrot.slane %v257, %v1194
      %v1196 = vlaneseq
      %v1197 = vshrl.u32 %v1196, 7
      %v1198 = vsub.s32 6, %v1197
      %v1199 = vrot.slane %v257, %v1198
      %v1200 = vlaneseq
      %v1201 = vshrl.u32 %v1200, 7
      %v1202 = vsub.s32 2, %v1201
      %v1203 = vrot.slane %v258, %v1202
      %v1204 = vlaneseq
      %v1205 = vshrl.u32 %v1204, 7
      %v1206 = vsub.s32 6, %v1205
      %v1207 = vrot.slane %v258, %v1206
      %v1208 = vlaneseq
      %v1209 = vshrl.u32 %v1208, 7
      %v1210 = vsub.s32 2, %v1209
      %v1211 = vrot.slane %v259, %v1210
      %v1212 = vlaneseq
      %v1213 = vshrl.u32 %v1212, 7
      %v1214 = vsub.s32 6, %v1213
      %v1215 = vrot.slane %v259, %v1214
      %v1216 = vlaneseq
      %v1217 = vshrl.u32 %v1216, 7
      %v1218 = vsub.s32 2, %v1217
      %v1219 = vrot.slane %v260, %v1218
      %v1220 = vlaneseq
      %v1221 = vshrl.u32 %v1220, 7
      %v1222 = vsub.s32 6, %v1221
      %v1223 = vrot.slane %v260, %v1222
      %v1224 = vlaneseq
      %v1225 = vshrl.u32 %v1224, 7
      %v1226 = vsub.s32 2, %v1225
      %v1227 = vrot.slane %v261, %v1226
      %v1228 = vlaneseq
      %v1229 = vshrl.u32 %v1228, 7
      %v1230 = vsub.s32 6, %v1229
      %v1231 = vrot.slane %v261, %v1230
      %v1248 = vlaneseq
      %v1249 = vshrl.u32 %v1248, 7
      %v1250 = vsub.s32 2, %v1249
      %v1251 = vrot.slane %v1171, %v1250
      %v1252 = vlaneseq
      %v1253 = vshrl.u32 %v1252, 7
      %v1254 = vsub.s32 2, %v1253
      %v1255 = vrot.slane %v1175, %v1254
      %v1256 = vlaneseq
      %v1257 = vshrl.u32 %v1256, 7
      %v1258 = vsub.s32 2, %v1257
      %v1259 = vrot.slane %v1179, %v1258
      %v1260 = vlaneseq
      %v1261 = vshrl.u32 %v1260, 7
      %v1262 = vsub.s32 2, %v1261
      %v1263 = vrot.slane %v1183, %v1262
      %v1264 = vlaneseq
      %v1265 = vshrl.u32 %v1264, 7
      %v1266 = vsub.s32 2, %v1265
      %v1267 = vrot.slane %v1187, %v1266
      %v1268 = vlaneseq
      %v1269 = vshrl.u32 %v1268, 7
      %v1270 = vsub.s32 2, %v1269
      %v1271 = vrot.slane %v1191, %v1270
      %v1272 = vlaneseq
      %v1273 = vshrl.u32 %v1272, 7
      %v1274 = vsub.s32 2, %v1273
      %v1275 = vrot.slane %v1195, %v1274
      %v1276 = vlaneseq
      %v1277 = vshrl.u32 %v1276, 7
      %v1278 = vsub.s32 2, %v1277
      %v1279 = vrot.slane %v1199, %v1278
      %v1280 = vlaneseq
      %v1281 = vshrl.u32 %v1280, 7
      %v1282 = vsub.s32 2, %v1281
      %v1283 = vrot.slane %v1203, %v1282
      %v1284 = vlaneseq
      %v1285 = vshrl.u32 %v1284, 7
      %v1286 = vsub.s32 2, %v1285
      %v1287 = vrot.slane %v1207, %v1286
      %v1288 = vlaneseq
      %v1289 = vshrl.u32 %v1288, 7
      %v1290 = vsub.s32 2, %v1289
      %v1291 = vrot.slane %v1211, %v1290
      %v1292 = vlaneseq
      %v1293 = vshrl.u32 %v1292, 7
      %v1294 = vsub.s32 2, %v1293
      %v1295 = vrot.slane %v1215, %v1294
      %v1296 = vlaneseq
      %v1297 = vshrl.u32 %v1296, 7
      %v1298 = vsub.s32 2, %v1297
      %v1299 = vrot.slane %v1219, %v1298
      %v1300 = vlaneseq
      %v1301 = vshrl.u32 %v1300, 7
      %v1302 = vsub.s32 2, %v1301
      %v1303 = vrot.slane %v1223, %v1302
      %v1304 = vlaneseq
      %v1305 = vshrl.u32 %v1304, 7
      %v1306 = vsub.s32 2, %v1305
      %v1307 = vrot.slane %v1227, %v1306
      %v1308 = vlaneseq
      %v1309 = vshrl.u32 %v1308, 7
      %v1310 = vsub.s32 2, %v1309
      %v1311 = vrot.slane %v1231, %v1310
      %v1312 = vmul.f32 %v1166, %v1251
      %v1313 = vmul.f32 %v1166, %v1255
      %v1314 = vmul.f32 %v1166, %v1259
      %v1315 = vmul.f32 %v1166, %v1263
      %v1316 = vmul.f32 %v1166, %v1267
      %v1317 = vmul.f32 %v1166, %v1271
      %v1318 = vmul.f32 %v1166, %v1275
      %v1319 = vmul.f32 %v1166, %v1279
      %v1320 = vmul.f32 %v1166, %v1283
      %v1321 = vmul.f32 %v1166, %v1287
      %v1322 = vmul.f32 %v1166, %v1291
      %v1323 = vmul.f32 %v1166, %v1295
      %v1324 = vmul.f32 %v1166, %v1299
      %v1325 = vmul.f32 %v1166, %v1303
      %v1326 = vmul.f32 %v1166, %v1307
      %v1327 = vmul.f32 %v1166, %v1311
      %v1328 = vadd.f32 %v1148, %v1312
      %v1329 = vadd.f32 %v1149, %v1313
      %v1330 = vadd.f32 %v1150, %v1314
      %v1331 = vadd.f32 %v1151, %v1315
      %v1332 = vadd.f32 %v1152, %v1316
      %v1333 = vadd.f32 %v1153, %v1317
      %v1334 = vadd.f32 %v1154, %v1318
      %v1335 = vadd.f32 %v1155, %v1319
      %v1336 = vadd.f32 %v1156, %v1320
      %v1337 = vadd.f32 %v1157, %v1321
      %v1338 = vadd.f32 %v1158, %v1322
      %v1339 = vadd.f32 %v1159, %v1323
      %v1340 = vadd.f32 %v1160, %v1324
      %v1341 = vadd.f32 %v1161, %v1325
      %v1342 = vadd.f32 %v1162, %v1326
      %v1343 = vadd.f32 %v1163, %v1327
      %1344 = vst [vmem:[%s244] sm:$0xff] %v1328
      %1345 = vst [vmem:[%s244 + $0x8] sm:$0xff] %v1329
      %1346 = vst [vmem:[%s244 + $0x10] sm:$0xff] %v1330
      %1347 = vst [vmem:[%s244 + $0x18] sm:$0xff] %v1331
      %1348 = vst [vmem:[%s244 + $0x20] sm:$0xff] %v1332
      %1349 = vst [vmem:[%s244 + $0x28] sm:$0xff] %v1333
      %1350 = vst [vmem:[%s244 + $0x30] sm:$0xff] %v1334
      %1351 = vst [vmem:[%s244 + $0x38] sm:$0xff] %v1335
      %1352 = vst [vmem:[%s244 + $0x40] sm:$0xff] %v1336
      %1353 = vst [vmem:[%s244 + $0x48] sm:$0xff] %v1337
      %1354 = vst [vmem:[%s244 + $0x50] sm:$0xff] %v1338
      %1355 = vst [vmem:[%s244 + $0x58] sm:$0xff] %v1339
      %1356 = vst [vmem:[%s244 + $0x60] sm:$0xff] %v1340
      %1357 = vst [vmem:[%s244 + $0x68] sm:$0xff] %v1341
      %1358 = vst [vmem:[%s244 + $0x70] sm:$0xff] %v1342
      %1359 = vst [vmem:[%s244 + $0x78] sm:$0xff] %v1343
      %s1360 = smul.u32 16, %s19
      %p1361 = scmp.lt.s32.totalorder %s18, 0
      %s1362 = scalar_select %p1361, %s18, 0
      %p1363 = scmp.lt.s32.totalorder %s1360, 31
      %s1364 = scalar_select %p1363, %s1360, 31
      %s1365 = smul.addr %s1362, 32
      %s1366 = sadd.s32 %s1364, %s1365
      %s1367 = smul.addr %s1366, 8
      %s1368 = scalar_lea.vmem %s3, %s1367
      // Predicated region
      $region33: #{conv1x1_pad1_add.1} parent=31 // pred_check
        %p1369 = pneg %p123
      $region34: #{conv1x1_pad1_add.1} parent=31 // pred_check_branch
        %1371 = sbr.rel (%p1369) target = $region36
      $region35: #{conv1x1_pad1_add.1} parent=31 // pred_region
        %s1372 = smul.u32 16, %s19
      $region36: #{conv1x1_pad1_add.1} parent=31 // pred_fallthru
        _
    $region32: #{conv1x1_pad1_add.1} parent=5 // pred_fallthru
      _
    %p1373 = scmp.le.s32.totalorder 2, %s9
    // Predicated region
    $region37: #{conv1x1_pad1_add.1} parent=5 // pred_check
      %p1374 = pneg %p1373
    $region38: #{conv1x1_pad1_add.1} parent=5 // pred_check_branch
      %1376 = sbr.rel (%p1374) target = $region40
    $region39: #{conv1x1_pad1_add.1} parent=5 // pred_region
      %s1377 = ssub.s32 %s9, 2
      // Predicated region
      $region41: #{conv1x1_pad1_add.1} parent=39 // pred_check
        %p1378 = pneg %p129
      $region42: #{conv1x1_pad1_add.1} parent=39 // pred_check_branch
        %1380 = sbr.rel (%p1378) target = $region44
      $region43: #{conv1x1_pad1_add.1} parent=39 // pred_region
        %s1381 = smul.u32 16, %s21
        %p1382 = scmp.lt.s32.totalorder %s20, 0
        %s1383 = scalar_select %p1382, %s20, 0
        %p1384 = scmp.lt.s32.totalorder %s1381, 31
        %s1385 = scalar_select %p1384, %s1381, 31
        %s1386 = smul.addr %s1383, 32
        %s1387 = sadd.s32 %s1385, %s1386
        %s1388 = smul.addr %s1387, 8
        %s1389 = scalar_lea.vmem %s3, %s1388
      $region44: #{conv1x1_pad1_add.1} parent=39 // pred_fallthru
        _
    $region40: #{conv1x1_pad1_add.1} parent=5 // pred_fallthru
      _
  $region6: #{conv1x1_pad1_add.1} parent=0 // loop_footer
    %s13 = sadd.s32 1, %s9
  $region7: #{conv1x1_pad1_add.1} parent=0 // loop_footer_branch
    %8 = sbr.rel target = $region3
  $region8: #{conv1x1_pad1_add.1} parent=0 // loop_exit
    _

</llo_original>
